<compile_context>
chip_gen: v6e
topology: v6e:2x2x1
jax: 0.10.0
libtpu: 0.0.40
codegen_flags: <defaults>
</compile_context>

<pallas_src>
import functools

import jax
import jax.numpy as jnp
from jax import lax
from jax.experimental import pallas as pl
from jax.experimental.pallas import tpu as pltpu

D_MODEL = 32
HIDDEN = 64
LN_EPS = 1e-5


def _ffn_kernel(x_ref, w1t_ref, b1_ref, w2t_ref, p_ref, o_ref, *, chunk, n_chunks):
    # x_ref / o_ref : (tile, d_model) f32   -- natural row-major blocks
    # w1t_ref       : (hidden, d_model) bf16 (resident)
    # w2t_ref       : (d_model, hidden) bf16 (resident)
    # b1_ref        : (hidden, 1) f32
    # p_ref         : (d_model, 3) f32 = [b2 | gamma | beta]
    d_model = x_ref.shape[1]
    inv_d = jnp.float32(1.0 / d_model)

    w1t = w1t_ref[...]
    w2t = w2t_ref[...]
    b1 = b1_ref[...]
    b2 = p_ref[:, 0:1]
    gamma = p_ref[:, 1:2]
    beta = p_ref[:, 2:3]

    def body(c, carry):
        start = pl.multiple_of(c * chunk, chunk)
        x_nat = x_ref[pl.ds(start, chunk), :]               # (chunk, d_model) f32
        xt = jnp.transpose(x_nat)                           # (d_model, chunk) lane-dense

        # Linear 1 + ReLU (bf16 MXU operands, f32 accumulation) -> (hidden, chunk)
        h = jnp.dot(w1t, xt.astype(jnp.bfloat16),
                    preferred_element_type=jnp.float32)
        h = jnp.maximum(h + b1, 0.0)

        # Linear 2 + bias + residual (f32) -> (d_model, chunk)
        y = jnp.dot(w2t, h.astype(jnp.bfloat16),
                    preferred_element_type=jnp.float32)
        y = y + b2 + xt

        # LayerNorm over d_model (sublane axis), two-pass biased variance.
        mean = jnp.sum(y, axis=0, keepdims=True) * inv_d
        yc = y - mean
        var = jnp.sum(yc * yc, axis=0, keepdims=True) * inv_d
        y = yc * lax.rsqrt(var + LN_EPS)
        y = y * gamma + beta

        # Back to the natural (chunk, d_model) layout and store.
        o_ref[pl.ds(start, chunk), :] = jnp.transpose(y).astype(o_ref.dtype)
        return carry

    lax.fori_loop(0, n_chunks, body, 0, unroll=True)


def _pick_tile(n, tile_n):
    """Row-tile size: big DMA tiles; >=2 programs for moderate n (v7x megacore)."""
    if n <= 512:
        return n                                    # single full-extent block
    if n >= 2 * tile_n:
        return tile_n
    half = -(-n // 2)                               # cdiv(n, 2)
    return min(tile_n, ((half + 511) // 512) * 512)


def ffn_forward(x, w1, b1, w2, b2, gamma, beta, *, tile_n=8192):
    """x: (seq, batch, d_model) float32. Returns the same shape."""
    seq, bsz, d_model = x.shape
    hidden = w1.shape[1]
    n = seq * bsz

    x2 = x.reshape(n, d_model)                      # contiguous view, no HBM pass

    tile = _pick_tile(n, tile_n)
    chunk = 512 if tile % 512 == 0 else tile        # in-kernel compute sub-chunk
    n_chunks = tile // chunk
    grid = (pl.cdiv(n, tile),)                      # ragged last block masked by Pallas

    # Pre-transposed bf16 weights (tiny, resident); biases / LN params stay f32.
    w1t = w1.T.astype(jnp.bfloat16)                           # (hidden, d_model)
    w2t = w2.T.astype(jnp.bfloat16)                           # (d_model, hidden)
    b1c = b1.reshape(hidden, 1).astype(jnp.float32)           # (hidden, 1)
    params = jnp.stack([b2, gamma, beta], axis=1).astype(jnp.float32)  # (d_model, 3)

    kernel = functools.partial(_ffn_kernel, chunk=chunk, n_chunks=n_chunks)

    cost = pl.CostEstimate(
        flops=4 * n * d_model * hidden,
        transcendentals=n,
        bytes_accessed=8 * n * d_model,
    )

    out = pl.pallas_call(
        kernel,
        out_shape=jax.ShapeDtypeStruct((n, d_model), x.dtype),
        grid_spec=pltpu.PrefetchScalarGridSpec(
            num_scalar_prefetch=0,
            grid=grid,
            in_specs=[
                pl.BlockSpec((tile, d_model), lambda i: (i, 0)),    # x rows (natural)
                pl.BlockSpec((hidden, d_model), lambda i: (0, 0)),  # W1^T (resident)
                pl.BlockSpec((hidden, 1), lambda i: (0, 0)),        # b1
                pl.BlockSpec((d_model, hidden), lambda i: (0, 0)),  # W2^T (resident)
                pl.BlockSpec((d_model, 3), lambda i: (0, 0)),       # [b2 | gamma | beta]
            ],
            out_specs=pl.BlockSpec((tile, d_model), lambda i: (i, 0)),
        ),
        compiler_params=pltpu.CompilerParams(
            dimension_semantics=("parallel",)),     # shards row tiles across TCs (v7x)
        cost_estimate=cost,
    )(x2, w1t, b1c, w2t, params)

    return out.reshape(seq, bsz, d_model)


if __name__ == "__main__":
    key = jax.random.PRNGKey(0)
    k_x, k_w1, k_b1, k_w2, k_b2 = jax.random.split(key, 5)

    seq, bsz = 8, 2
    x = jax.random.normal(k_x, (seq, bsz, D_MODEL), dtype=jnp.float32)

    # Deterministic parameter init (Kaiming-uniform-like scale, fixed seed).
    lim1 = 1.0 / (D_MODEL ** 0.5)
    lim2 = 1.0 / (HIDDEN ** 0.5)
    w1 = jax.random.uniform(k_w1, (D_MODEL, HIDDEN), jnp.float32, -lim1, lim1)
    b1 = jax.random.uniform(k_b1, (HIDDEN,), jnp.float32, -lim1, lim1)
    w2 = jax.random.uniform(k_w2, (HIDDEN, D_MODEL), jnp.float32, -lim2, lim2)
    b2 = jax.random.uniform(k_b2, (D_MODEL,), jnp.float32, -lim2, lim2)
    gamma = jnp.ones((D_MODEL,), jnp.float32)
    beta = jnp.zeros((D_MODEL,), jnp.float32)

    out = ffn_forward(x, w1, b1, w2, b2, gamma, beta)
    out = jax.block_until_ready(out)

    # Pure-JAX f32 reference (kernel uses bf16 matmul operands with f32
    # accumulation, so allow a slightly looser tolerance).
    def ref(x):
        h = jnp.maximum(x @ w1 + b1, 0.0)
        y = h @ w2 + b2 + x
        mu = y.mean(-1, keepdims=True)
        var = ((y - mu) ** 2).mean(-1, keepdims=True)
        return (y - mu) * lax.rsqrt(var + LN_EPS) * gamma + beta

    assert out.shape == (seq, bsz, D_MODEL)
    assert jnp.allclose(out, ref(x), atol=2e-2, rtol=1e-2)
    print("KERNEL_OK")
</pallas_src>

<mosaic_0001>
module attributes {stable_mosaic.version = 11 : i64} {
  func.func @_ffn_kernel(%arg0: i32, %arg1: memref<16x32xf32, #tpu.memory_space<vmem>>, %arg2: memref<64x32xbf16, #tpu.memory_space<vmem>>, %arg3: memref<64x1xf32, #tpu.memory_space<vmem>>, %arg4: memref<32x64xbf16, #tpu.memory_space<vmem>>, %arg5: memref<32x3xf32, #tpu.memory_space<vmem>>, %arg6: memref<16x32xf32, #tpu.memory_space<vmem>>) attributes {dimension_semantics = [#tpu.dimension_semantics<parallel>], iteration_bounds = array<i64: 1>, scalar_prefetch = 0 : i64, scratch_operands = 0 : i64, tpu.core_type = #tpu.core_type<tc>, window_params = [{transform_indices = @transform_0, window_bounds = array<i64: 16, 32>}, {pipeline_mode = #tpu.pipeline_mode<synchronous>, transform_indices = @transform_1, window_bounds = array<i64: 64, 32>}, {pipeline_mode = #tpu.pipeline_mode<synchronous>, transform_indices = @transform_2, window_bounds = array<i64: 64, 1>}, {pipeline_mode = #tpu.pipeline_mode<synchronous>, transform_indices = @transform_3, window_bounds = array<i64: 32, 64>}, {pipeline_mode = #tpu.pipeline_mode<synchronous>, transform_indices = @transform_4, window_bounds = array<i64: 32, 3>}, {transform_indices = @transform_5, window_bounds = array<i64: 16, 32>}]} {
    %c0 = arith.constant 0 : index
    %c0_0 = arith.constant 0 : index
    %0 = vector.load %arg2[%c0, %c0_0] : memref<64x32xbf16, #tpu.memory_space<vmem>>, vector<64x32xbf16>
    %c0_1 = arith.constant 0 : index
    %c0_2 = arith.constant 0 : index
    %1 = vector.load %arg4[%c0_1, %c0_2] : memref<32x64xbf16, #tpu.memory_space<vmem>>, vector<32x64xbf16>
    %c0_3 = arith.constant 0 : index
    %c0_4 = arith.constant 0 : index
    %2 = vector.load %arg3[%c0_3, %c0_4] : memref<64x1xf32, #tpu.memory_space<vmem>>, vector<64x1xf32>
    %c0_5 = arith.constant 0 : index
    %c0_6 = arith.constant 0 : index
    %3 = vector.load %arg5[%c0_5, %c0_6] : memref<32x3xf32, #tpu.memory_space<vmem>>, vector<32x1xf32>
    %c0_7 = arith.constant 0 : index
    %c1 = arith.constant 1 : index
    %4 = vector.load %arg5[%c0_7, %c1] : memref<32x3xf32, #tpu.memory_space<vmem>>, vector<32x1xf32>
    %c0_8 = arith.constant 0 : index
    %c2 = arith.constant 2 : index
    %5 = vector.load %arg5[%c0_8, %c2] : memref<32x3xf32, #tpu.memory_space<vmem>>, vector<32x1xf32>
    %cst = arith.constant 3.125000e-02 : f32
    %c0_i32 = arith.constant 0 : i32
    %c16_i32 = arith.constant 16 : i32
    %6 = arith.muli %c0_i32, %c16_i32 : i32
    %7 = tpu.assume_multiple %6, 16 : i32
    %8 = arith.index_cast %7 : i32 to index
    %c0_9 = arith.constant 0 : index
    %9 = vector.load %arg1[%8, %c0_9] : memref<16x32xf32, #tpu.memory_space<vmem>>, vector<16x32xf32>
    %10 = tpu.transpose %9, [1, 0] : vector<16x32xf32> -> vector<32x16xf32>
    %11 = arith.truncf %10 : vector<32x16xf32> to vector<32x16xbf16>
    %cst_10 = arith.constant dense<0.000000e+00> : vector<64x16xf32>
    %12 = tpu.matmul %0, %11, %cst_10 {dimension_numbers = #tpu.dot_dimension_numbers<[1], [0], [0], [1], [0, 0, 1, 1], [], []>} : vector<64x32xbf16>, vector<32x16xbf16>, vector<64x16xf32> -> vector<64x16xf32>
    %13 = vector.broadcast %2 : vector<64x1xf32> to vector<64x16xf32>
    %14 = arith.addf %12, %13 : vector<64x16xf32>
    %cst_11 = arith.constant 0.000000e+00 : f32
    %15 = vector.broadcast %cst_11 : f32 to vector<64x16xf32>
    %16 = arith.maximumf %14, %15 : vector<64x16xf32>
    %17 = arith.truncf %16 : vector<64x16xf32> to vector<64x16xbf16>
    %cst_12 = arith.constant dense<0.000000e+00> : vector<32x16xf32>
    %18 = tpu.matmul %1, %17, %cst_12 {dimension_numbers = #tpu.dot_dimension_numbers<[1], [0], [0], [1], [0, 0, 1, 1], [], []>} : vector<32x64xbf16>, vector<64x16xbf16>, vector<32x16xf32> -> vector<32x16xf32>
    %19 = vector.broadcast %3 : vector<32x1xf32> to vector<32x16xf32>
    %20 = arith.addf %18, %19 : vector<32x16xf32>
    %21 = arith.addf %20, %10 : vector<32x16xf32>
    %cst_13 = arith.constant dense<0.000000e+00> : vector<16xf32>
    %22 = vector.multi_reduction <add>, %21, %cst_13 [0] : vector<32x16xf32> to vector<16xf32>
    %23 = vector.shape_cast %22 : vector<16xf32> to vector<1x16xf32>
    %24 = vector.broadcast %cst : f32 to vector<1x16xf32>
    %25 = arith.mulf %23, %24 : vector<1x16xf32>
    %26 = vector.broadcast %25 : vector<1x16xf32> to vector<32x16xf32>
    %27 = arith.subf %21, %26 : vector<32x16xf32>
    %28 = arith.mulf %27, %27 : vector<32x16xf32>
    %cst_14 = arith.constant dense<0.000000e+00> : vector<16xf32>
    %29 = vector.multi_reduction <add>, %28, %cst_14 [0] : vector<32x16xf32> to vector<16xf32>
    %30 = vector.shape_cast %29 : vector<16xf32> to vector<1x16xf32>
    %31 = vector.broadcast %cst : f32 to vector<1x16xf32>
    %32 = arith.mulf %30, %31 : vector<1x16xf32>
    %cst_15 = arith.constant 9.99999974E-6 : f32
    %33 = vector.broadcast %cst_15 : f32 to vector<1x16xf32>
    %34 = arith.addf %32, %33 : vector<1x16xf32>
    %35 = math.rsqrt %34 : vector<1x16xf32>
    %36 = vector.broadcast %35 : vector<1x16xf32> to vector<32x16xf32>
    %37 = arith.mulf %27, %36 : vector<32x16xf32>
    %38 = vector.broadcast %4 : vector<32x1xf32> to vector<32x16xf32>
    %39 = arith.mulf %37, %38 : vector<32x16xf32>
    %40 = vector.broadcast %5 : vector<32x1xf32> to vector<32x16xf32>
    %41 = arith.addf %39, %40 : vector<32x16xf32>
    %42 = tpu.transpose %41, [1, 0] : vector<32x16xf32> -> vector<16x32xf32>
    %43 = arith.index_cast %7 : i32 to index
    %c0_16 = arith.constant 0 : index
    %44 = vector.load %arg6[%43, %c0_16] : memref<16x32xf32, #tpu.memory_space<vmem>>, vector<16x32xf32>
    tpu.vector_store %arg6[%43, %c0_16], %42 {strides = array<i32>} : memref<16x32xf32, #tpu.memory_space<vmem>>, vector<16x32xf32>,
    %c1_i32 = arith.constant 1 : i32
    return
  }
  func.func @transform_0(%arg0: i32) -> (i32, i32) {
    %c0_i32 = arith.constant 0 : i32
    %c0_i32_0 = arith.constant 0 : i32
    return %arg0, %c0_i32 : i32, i32
  }
  func.func @transform_1(%arg0: i32) -> (i32, i32) {
    %c0_i32 = arith.constant 0 : i32
    %c0_i32_0 = arith.constant 0 : i32
    %c0_i32_1 = arith.constant 0 : i32
    return %c0_i32, %c0_i32_0 : i32, i32
  }
  func.func @transform_2(%arg0: i32) -> (i32, i32) {
    %c0_i32 = arith.constant 0 : i32
    %c0_i32_0 = arith.constant 0 : i32
    %c0_i32_1 = arith.constant 0 : i32
    return %c0_i32, %c0_i32_0 : i32, i32
  }
  func.func @transform_3(%arg0: i32) -> (i32, i32) {
    %c0_i32 = arith.constant 0 : i32
    %c0_i32_0 = arith.constant 0 : i32
    %c0_i32_1 = arith.constant 0 : i32
    return %c0_i32, %c0_i32_0 : i32, i32
  }
  func.func @transform_4(%arg0: i32) -> (i32, i32) {
    %c0_i32 = arith.constant 0 : i32
    %c0_i32_0 = arith.constant 0 : i32
    %c0_i32_1 = arith.constant 0 : i32
    return %c0_i32, %c0_i32_0 : i32, i32
  }
  func.func @transform_5(%arg0: i32) -> (i32, i32) {
    %c0_i32 = arith.constant 0 : i32
    %c0_i32_0 = arith.constant 0 : i32
    return %arg0, %c0_i32 : i32, i32
  }
}

</mosaic_0001>

<llo_original>
// kernel: tpu_custom_call.1
$region0: #{tpu_custom_call.1}
  #allocation0 [shape = 'u32[]', space=smem, size = 0x4, offset = 0x4, fixed_abs, tag = 'smem constant byte address 0x4 - core index']
  #allocation1 [shape = 'u32[144,128]{1,0:T(1,128)}', space=vmem, size = 0x12000, scoped, tag = 'internal scratch']
  %s0 = inlined_call_operand.vmem [shape: f32[16,32], index: 0, kind: input, shape index: {}]
  %s1 = inlined_call_operand.vmem [shape: bf16[64,32], index: 1, kind: input, shape index: {}]
  %s2 = inlined_call_operand.vmem [shape: f32[64,1], index: 2, kind: input, shape index: {}]
  %s3 = inlined_call_operand.vmem [shape: bf16[32,64], index: 3, kind: input, shape index: {}]
  %s4 = inlined_call_operand.vmem [shape: f32[32,3], index: 4, kind: input, shape index: {}]
  %s5 = inlined_call_operand.hbm [shape: f32[16,32], index: 5, kind: output, shape index: {}]
  %s6 = sld [smem:[#allocation0]]
  $region30: #{tpu_custom_call.1} parent=0
    _
  %s8 = ssub.s32 1, %s6
  %s9 = scalar_select 0, %s8, %s6
  $region1: #{tpu_custom_call.1} parent=0
    #allocation2 [shape = 'u8[8192]{0}', space=vmem, size = 0x2000, scoped, tag = 'output window, operand 0, single buffered']
    #allocation3 [shape = 's32[1]{0}', space=sflag, size = 0x4, scoped, tag = 'scoped memory for tpu_custom_call.1']
    %10 = vsyncpa [#allocation3], 0
    // Predicated region
    $region2: #{tpu_custom_call.1} parent=1 // pred_check
      _
    $region3: #{tpu_custom_call.1} parent=1 // pred_check_branch
      %12 = sbr.rel (0) target = $region5
    $region4: #{tpu_custom_call.1} parent=1 // pred_region
      _
    $region5: #{tpu_custom_call.1} parent=1 // pred_fallthru
      _
    // Predicated region
    $region6: #{tpu_custom_call.1} parent=1 // pred_check
      _
    $region7: #{tpu_custom_call.1} parent=1 // pred_check_branch
      %14 = sbr.rel (0) target = $region9
    $region8: #{tpu_custom_call.1} parent=1 // pred_region
      _
    $region9: #{tpu_custom_call.1} parent=1 // pred_fallthru
      _
    // Predicated region
    $region10: #{tpu_custom_call.1} parent=1 // pred_check
      _
    $region11: #{tpu_custom_call.1} parent=1 // pred_check_branch
      %16 = sbr.rel (0) target = $region13
    $region12: #{tpu_custom_call.1} parent=1 // pred_region
      _
    $region13: #{tpu_custom_call.1} parent=1 // pred_fallthru
      _
    // Predicated region
    $region14: #{tpu_custom_call.1} parent=1 // pred_check
      _
    $region15: #{tpu_custom_call.1} parent=1 // pred_check_branch
      %18 = sbr.rel (0) target = $region17
    $region16: #{tpu_custom_call.1} parent=1 // pred_region
      _
    $region17: #{tpu_custom_call.1} parent=1 // pred_fallthru
      _
    // Predicated region
    $region18: #{tpu_custom_call.1} parent=1 // pred_check
      _
    $region19: #{tpu_custom_call.1} parent=1 // pred_check_branch
      %20 = sbr.rel (0) target = $region21
    $region20: #{tpu_custom_call.1} parent=1 // pred_region
      _
    $region21: #{tpu_custom_call.1} parent=1 // pred_fallthru
      _
    %v22 = vld [vmem:[%s1] sm:$0xf]
    %v23 = vld [vmem:[%s1 + $0x4] sm:$0xf]
    %v24 = vld [vmem:[%s1 + $0x8] sm:$0xf]
    %v25 = vld [vmem:[%s1 + $0xc] sm:$0xf]
    %v26 = vld [vmem:[%s1 + $0x10] sm:$0xf]
    %v27 = vld [vmem:[%s1 + $0x14] sm:$0xf]
    %v28 = vld [vmem:[%s1 + $0x18] sm:$0xf]
    %v29 = vld [vmem:[%s1 + $0x1c] sm:$0xf]
    %v30 = vld [vmem:[%s3] sm:$0xf]
    %v31 = vld [vmem:[%s3 + $0x4] sm:$0xf]
    %v32 = vld [vmem:[%s3 + $0x8] sm:$0xf]
    %v33 = vld [vmem:[%s3 + $0xc] sm:$0xf]
    %v34 = vld [vmem:[%s2] sm:$0xff]
    %v35 = vld [vmem:[%s2 + $0x8] sm:$0xff]
    %v36 = vld [vmem:[%s2 + $0x10] sm:$0xff]
    %v37 = vld [vmem:[%s2 + $0x18] sm:$0xff]
    %v38 = vld [vmem:[%s2 + $0x20] sm:$0xff]
    %v39 = vld [vmem:[%s2 + $0x28] sm:$0xff]
    %v40 = vld [vmem:[%s2 + $0x30] sm:$0xff]
    %v41 = vld [vmem:[%s2 + $0x38] sm:$0xff]
    %v42 = vld [vmem:[%s4] sm:$0xff]
    %v43 = vld [vmem:[%s4 + $0x8] sm:$0xff]
    %v44 = vld [vmem:[%s4 + $0x10] sm:$0xff]
    %v45 = vld [vmem:[%s4 + $0x18] sm:$0xff]
    %v46 = vld [vmem:[%s0] sm:$0xff]
    %v47 = vld [vmem:[%s0 + $0x8] sm:$0xff]
    %48 = vxpose.xlu0.b32.start [1/16] %v46, 128
    %49 = vxpose.xlu0.b32.cont [2/16] %v47, 128
    %50 = vxpose.xlu0.b32.cont [3/16] 0.0, 128
    %51 = vxpose.xlu0.b32.cont [4/16] 0.0, 128
    %52 = vxpose.xlu0.b32.cont [5/16] 0.0, 128
    %53 = vxpose.xlu0.b32.cont [6/16] 0.0, 128
    %54 = vxpose.xlu0.b32.cont [7/16] 0.0, 128
    %55 = vxpose.xlu0.b32.cont [8/16] 0.0, 128
    %56 = vxpose.xlu0.b32.cont [9/16] 0.0, 128
    %57 = vxpose.xlu0.b32.cont [10/16] 0.0, 128
    %58 = vxpose.xlu0.b32.cont [11/16] 0.0, 128
    %59 = vxpose.xlu0.b32.cont [12/16] 0.0, 128
    %60 = vxpose.xlu0.b32.cont [13/16] 0.0, 128
    %61 = vxpose.xlu0.b32.cont [14/16] 0.0, 128
    %62 = vxpose.xlu0.b32.cont [15/16] 0.0, 128
    %63 = vxpose.xlu0.b32.end [16/16] 0.0, 128
    %v64 = vpop.trf.xlu0
    %v65 = vpop.trf.xlu0
    %v66 = vpop.trf.xlu0
    %v67 = vpop.trf.xlu0
    %v68 = vpop.trf.xlu0
    %v69 = vpop.trf.xlu0
    %v70 = vpop.trf.xlu0
    %v71 = vpop.trf.xlu0
    %v72 = vpop.trf.xlu0
    %v73 = vpop.trf.xlu0
    %v74 = vpop.trf.xlu0
    %v75 = vpop.trf.xlu0
    %v76 = vpop.trf.xlu0
    %v77 = vpop.trf.xlu0
    %v78 = vpop.trf.xlu0
    %v79 = vpop.trf.xlu0
    %v80 = vpack.c.bf16 %v65, %v64
    %v81 = vpack.c.bf16 %v67, %v66
    %83 = vset.pattern.permute.xlu0 0
    %84 = vperm.xlu0 %83, %v34
    %v85 = vpop.permute.xlu0 %84
    %88 = vset.pattern.permute.xlu0 0
    %89 = vperm.xlu0 %88, %v35
    %v90 = vpop.permute.xlu0 %89
    %93 = vset.pattern.permute.xlu0 0
    %94 = vperm.xlu0 %93, %v36
    %v95 = vpop.permute.xlu0 %94
    %98 = vset.pattern.permute.xlu0 0
    %99 = vperm.xlu0 %98, %v37
    %v100 = vpop.permute.xlu0 %99
    %103 = vset.pattern.permute.xlu0 0
    %104 = vperm.xlu0 %103, %v38
    %v105 = vpop.permute.xlu0 %104
    %108 = vset.pattern.permute.xlu0 0
    %109 = vperm.xlu0 %108, %v39
    %v110 = vpop.permute.xlu0 %109
    %113 = vset.pattern.permute.xlu0 0
    %114 = vperm.xlu0 %113, %v40
    %v115 = vpop.permute.xlu0 %114
    %118 = vset.pattern.permute.xlu0 0
    %119 = vperm.xlu0 %118, %v41
    %v120 = vpop.permute.xlu0 %119
    %v130 = vunpack.c.l.b16 %v22
    %v131 = vunpack.c.l.b16 %v23
    %v132 = vunpack.c.l.b16 %v24
    %v133 = vunpack.c.l.b16 %v25
    %v134 = vunpack.c.l.b16 %v26
    %v135 = vunpack.c.l.b16 %v27
    %v136 = vunpack.c.l.b16 %v28
    %v137 = vunpack.c.l.b16 %v29
    %v138 = vpack.c.b16 %v131, %v130
    %v139 = vpack.c.b16 %v133, %v132
    %v140 = vpack.c.b16 %v135, %v134
    %v141 = vpack.c.b16 %v137, %v136
    %vm142 = vcmask 261120
    %v144 = vsel %vm142, %v138, 0
    %v147 = vsel %vm142, %v139, 0
    %v150 = vsel %vm142, %v140, 0
    %v153 = vsel %vm142, %v141, 0
    %155 = vmatprep.subr.bf16.mxu0 0
    %156 = vmatpush1.bf16.msra.mxu0 0
    %157 = vmatprep.subr.bf16.mxu0 0
    %158 = vmatpush1.bf16.msra.mxu0 0
    %159 = vmatprep.subr.bf16.mxu0 0
    %160 = vmatpush1.bf16.msra.mxu0 0
    %161 = vmatprep.subr.bf16.mxu0 0
    %162 = vmatpush1.bf16.msra.mxu0 0
    %163 = vmatprep.subr.bf16.mxu0 0
    %164 = vmatpush1.bf16.msra.mxu0 0
    %165 = vmatprep.subr.bf16.mxu0 0
    %166 = vmatpush1.bf16.msra.mxu0 0
    %167 = vmatprep.subr.bf16.mxu0 0
    %168 = vmatpush1.bf16.msra.mxu0 %v81
    %169 = vmatprep.subr.bf16.mxu0 0
    %170 = vmatpush1.bf16.msra.mxu0 %v80
    %171 = vmatprep.subr.bf16.mxu0 0
    %172 = vmatpush2.bf16.msra.mxu0 0
    %173 = vmatprep.subr.bf16.mxu0 0
    %174 = vmatpush2.bf16.msra.mxu0 0
    %175 = vmatprep.subr.bf16.mxu0 0
    %176 = vmatpush2.bf16.msra.mxu0 0
    %177 = vmatprep.subr.bf16.mxu0 0
    %178 = vmatpush2.bf16.msra.mxu0 0
    %179 = vmatprep.subr.bf16.mxu0 0
    %180 = vmatpush2.bf16.msra.mxu0 0
    %181 = vmatprep.subr.bf16.mxu0 0
    %182 = vmatpush2.bf16.msra.mxu0 0
    %183 = vmatprep.subr.bf16.mxu0 0
    %184 = vmatpush2.bf16.msra.mxu0 0
    %185 = vmatprep.subr.bf16.mxu0 0
    %186 = vmatpush2.bf16.msra.mxu0 0
    %187 = vmatprep.mubr.bf16.mxu0 0
    %188 = vmatmul.mubr.bf16.gmra.mxu0 %v144
    %v189 = vpop.f32.mrf.mxu0
    %v190 = vadd.f32 %v85, %v189
    %v191 = vpop.f32.mrf.mxu0
    %v192 = vpop.f32.mrf.mxu0
    %v193 = vadd.f32 %v90, %v192
    %v194 = vpop.f32.mrf.mxu0
    %195 = vmatprep.mubr.bf16.mxu0 0
    %196 = vmatmul.mubr.bf16.gmra.mxu0 %v147
    %v197 = vpop.f32.mrf.mxu0
    %v198 = vadd.f32 %v95, %v197
    %v199 = vpop.f32.mrf.mxu0
    %v200 = vpop.f32.mrf.mxu0
    %v201 = vadd.f32 %v100, %v200
    %v202 = vpop.f32.mrf.mxu0
    %203 = vmatprep.mubr.bf16.mxu0 0
    %204 = vmatmul.mubr.bf16.gmra.mxu0 %v150
    %v205 = vpop.f32.mrf.mxu0
    %v206 = vadd.f32 %v105, %v205
    %v207 = vpop.f32.mrf.mxu0
    %v208 = vpop.f32.mrf.mxu0
    %v209 = vadd.f32 %v110, %v208
    %v210 = vpop.f32.mrf.mxu0
    %211 = vmatprep.mubr.bf16.mxu0 0
    %212 = vmatmul.mubr.bf16.gmra.mxu0 %v153
    %v213 = vpop.f32.mrf.mxu0
    %v214 = vadd.f32 %v115, %v213
    %v215 = vpop.f32.mrf.mxu0
    %v216 = vpop.f32.mrf.mxu0
    %v217 = vadd.f32 %v120, %v216
    %v218 = vpop.f32.mrf.mxu0
    %219 = vdwg.mxu0
    %v220 = vmax.f32 %v190, 0.0
    %v221 = vmax.f32 %v193, 0.0
    %v222 = vmax.f32 %v198, 0.0
    %v223 = vmax.f32 %v201, 0.0
    %v224 = vmax.f32 %v206, 0.0
    %v225 = vmax.f32 %v209, 0.0
    %v226 = vmax.f32 %v214, 0.0
    %v227 = vmax.f32 %v217, 0.0
    %v228 = vpack.c.bf16 %v221, %v220
    %v229 = vpack.c.bf16 %v223, %v222
    %v230 = vpack.c.bf16 %v225, %v224
    %v231 = vpack.c.bf16 %v227, %v226
    %233 = vset.pattern.permute.xlu0 0
    %234 = vperm.xlu0 %233, %v42
    %v235 = vpop.permute.xlu0 %234
    %238 = vset.pattern.permute.xlu0 0
    %239 = vperm.xlu0 %238, %v43
    %v240 = vpop.permute.xlu0 %239
    %243 = vset.pattern.permute.xlu0 0
    %244 = vperm.xlu0 %243, %v44
    %v245 = vpop.permute.xlu0 %244
    %248 = vset.pattern.permute.xlu0 0
    %249 = vperm.xlu0 %248, %v45
    %v250 = vpop.permute.xlu0 %249
    %v256 = vunpack.c.l.b16 %v30
    %v257 = vunpack.c.l.b16 %v31
    %v258 = vunpack.c.l.b16 %v32
    %v259 = vunpack.c.l.b16 %v33
    %v260 = vpack.c.b16 %v257, %v256
    %v261 = vpack.c.b16 %v259, %v258
    %vm262 = vcmask 523264
    %v264 = vsel %vm262, %v260, 0
    %v267 = vsel %vm262, %v261, 0
    %269 = vmatprep.subr.bf16.mxu0 0
    %270 = vmatpush1.bf16.msra.mxu0 0
    %271 = vmatprep.subr.bf16.mxu0 0
    %272 = vmatpush1.bf16.msra.mxu0 0
    %273 = vmatprep.subr.bf16.mxu0 0
    %274 = vmatpush1.bf16.msra.mxu0 0
    %275 = vmatprep.subr.bf16.mxu0 0
    %276 = vmatpush1.bf16.msra.mxu0 0
    %277 = vmatprep.subr.bf16.mxu0 0
    %278 = vmatpush1.bf16.msra.mxu0 %v231
    %279 = vmatprep.subr.bf16.mxu0 0
    %280 = vmatpush1.bf16.msra.mxu0 %v230
    %281 = vmatprep.subr.bf16.mxu0 0
    %282 = vmatpush1.bf16.msra.mxu0 %v229
    %283 = vmatprep.subr.bf16.mxu0 0
    %284 = vmatpush1.bf16.msra.mxu0 %v228
    %285 = vmatprep.subr.bf16.mxu0 0
    %286 = vmatpush2.bf16.msra.mxu0 0
    %287 = vmatprep.subr.bf16.mxu0 0
    %288 = vmatpush2.bf16.msra.mxu0 0
    %289 = vmatprep.subr.bf16.mxu0 0
    %290 = vmatpush2.bf16.msra.mxu0 0
    %291 = vmatprep.subr.bf16.mxu0 0
    %292 = vmatpush2.bf16.msra.mxu0 0
    %293 = vmatprep.subr.bf16.mxu0 0
    %294 = vmatpush2.bf16.msra.mxu0 0
    %295 = vmatprep.subr.bf16.mxu0 0
    %296 = vmatpush2.bf16.msra.mxu0 0
    %297 = vmatprep.subr.bf16.mxu0 0
    %298 = vmatpush2.bf16.msra.mxu0 0
    %299 = vmatprep.subr.bf16.mxu0 0
    %300 = vmatpush2.bf16.msra.mxu0 0
    %301 = vmatprep.mubr.bf16.mxu0 0
    %302 = vmatmul.mubr.bf16.gmra.mxu0 %v264
    %v303 = vpop.f32.mrf.mxu0
    %v304 = vadd.f32 %v235, %v303
    %v305 = vpop.f32.mrf.mxu0
    %v306 = vpop.f32.mrf.mxu0
    %v307 = vadd.f32 %v240, %v306
    %v308 = vpop.f32.mrf.mxu0
    %309 = vmatprep.mubr.bf16.mxu0 0
    %310 = vmatmul.mubr.bf16.gmra.mxu0 %v267
    %v311 = vpop.f32.mrf.mxu0
    %v312 = vadd.f32 %v245, %v311
    %v313 = vpop.f32.mrf.mxu0
    %v314 = vpop.f32.mrf.mxu0
    %v315 = vadd.f32 %v250, %v314
    %v316 = vpop.f32.mrf.mxu0
    %317 = vdwg.mxu0
    %v318 = vadd.f32 %v304, %v64
    %v319 = vadd.f32 %v307, %v65
    %v320 = vadd.f32 %v312, %v66
    %v321 = vadd.f32 %v315, %v67
    %vm322 = vcmask 130048
    %v323 = vsel %vm322, %v318, 0.0
    %v324 = vsel %vm322, %v319, 0.0
    %v325 = vadd.f32 %v323, %v324
    %v326 = vsel %vm322, %v320, 0.0
    %v327 = vadd.f32 %v325, %v326
    %v328 = vsel %vm322, %v321, 0.0
    %v329 = vadd.f32 %v327, %v328
    %v330 = vrot.slane %v329, 4
    %v331 = vadd.f32 %v329, %v330
    %v332 = vrot.slane %v331, 2
    %v333 = vadd.f32 %v331, %v332
    %v334 = vrot.slane %v333, 1
    %v335 = vadd.f32 %v333, %v334
    %v336 = vmul.f32 %v335, 0.03125
    %v337 = vsub.f32 %v318, %v336
    %v338 = vsub.f32 %v319, %v336
    %v339 = vsub.f32 %v320, %v336
    %v340 = vsub.f32 %v321, %v336
    %v341 = vmul.f32 %v337, %v337
    %v342 = vmul.f32 %v338, %v338
    %v343 = vmul.f32 %v339, %v339
    %v344 = vmul.f32 %v340, %v340
    %v345 = vsel %vm322, %v341, 0.0
    %v346 = vsel %vm322, %v342, 0.0
    %v347 = vadd.f32 %v345, %v346
    %v348 = vsel %vm322, %v343, 0.0
    %v349 = vadd.f32 %v347, %v348
    %v350 = vsel %vm322, %v344, 0.0
    %v351 = vadd.f32 %v349, %v350
    %v352 = vrot.slane %v351, 4
    %v353 = vadd.f32 %v351, %v352
    %v354 = vrot.slane %v353, 2
    %v355 = vadd.f32 %v353, %v354
    %v356 = vrot.slane %v355, 1
    %v357 = vadd.f32 %v355, %v356
    %v358 = vmul.f32 %v357, 0.03125
    %v359 = vadd.f32 %v358, 1e-05
    %v360 = vrsqrt.pop %v359
    %v361 = vmul.f32 %v337, %v360
    %v362 = vmul.f32 %v338, %v360
    %v363 = vmul.f32 %v339, %v360
    %v364 = vmul.f32 %v340, %v360
    %365 = vset.pattern.permute.xlu0 1
    %366 = vperm.xlu0 %365, %v42
    %v367 = vpop.permute.xlu0 %366
    %369 = vset.pattern.permute.xlu0 1
    %370 = vperm.xlu0 %369, %v43
    %v371 = vpop.permute.xlu0 %370
    %373 = vset.pattern.permute.xlu0 1
    %374 = vperm.xlu0 %373, %v44
    %v375 = vpop.permute.xlu0 %374
    %377 = vset.pattern.permute.xlu0 1
    %378 = vperm.xlu0 %377, %v45
    %v379 = vpop.permute.xlu0 %378
    %v381 = vmul.f32 %v361, %v367
    %v382 = vmul.f32 %v362, %v371
    %v383 = vmul.f32 %v363, %v375
    %v384 = vmul.f32 %v364, %v379
    %385 = vset.pattern.permute.xlu0 2
    %386 = vperm.xlu0 %385, %v42
    %v387 = vpop.permute.xlu0 %386
    %389 = vset.pattern.permute.xlu0 2
    %390 = vperm.xlu0 %389, %v43
    %v391 = vpop.permute.xlu0 %390
    %393 = vset.pattern.permute.xlu0 2
    %394 = vperm.xlu0 %393, %v44
    %v395 = vpop.permute.xlu0 %394
    %397 = vset.pattern.permute.xlu0 2
    %398 = vperm.xlu0 %397, %v45
    %v399 = vpop.permute.xlu0 %398
    %v401 = vadd.f32 %v381, %v387
    %v402 = vadd.f32 %v382, %v391
    %v403 = vadd.f32 %v383, %v395
    %v404 = vadd.f32 %v384, %v399
    %405 = vxpose.xlu0.b32.start [1/16] %v401, 128
    %406 = vxpose.xlu0.b32.cont [2/16] %v402, 128
    %407 = vxpose.xlu0.b32.cont [3/16] %v403, 128
    %408 = vxpose.xlu0.b32.cont [4/16] %v404, 128
    %409 = vxpose.xlu0.b32.cont [5/16] 0.0, 128
    %410 = vxpose.xlu0.b32.cont [6/16] 0.0, 128
    %411 = vxpose.xlu0.b32.cont [7/16] 0.0, 128
    %412 = vxpose.xlu0.b32.cont [8/16] 0.0, 128
    %413 = vxpose.xlu0.b32.cont [9/16] 0.0, 128
    %414 = vxpose.xlu0.b32.cont [10/16] 0.0, 128
    %415 = vxpose.xlu0.b32.cont [11/16] 0.0, 128
    %416 = vxpose.xlu0.b32.cont [12/16] 0.0, 128
    %417 = vxpose.xlu0.b32.cont [13/16] 0.0, 128
    %418 = vxpose.xlu0.b32.cont [14/16] 0.0, 128
    %419 = vxpose.xlu0.b32.cont [15/16] 0.0, 128
    %420 = vxpose.xlu0.b32.end [16/16] 0.0, 128
    %v421 = vpop.trf.xlu0
    %v422 = vpop.trf.xlu0
    %v423 = vpop.trf.xlu0
    %v424 = vpop.trf.xlu0
    %v425 = vpop.trf.xlu0
    %v426 = vpop.trf.xlu0
    %v427 = vpop.trf.xlu0
    %v428 = vpop.trf.xlu0
    %v429 = vpop.trf.xlu0
    %v430 = vpop.trf.xlu0
    %v431 = vpop.trf.xlu0
    %v432 = vpop.trf.xlu0
    %v433 = vpop.trf.xlu0
    %v434 = vpop.trf.xlu0
    %v435 = vpop.trf.xlu0
    %v436 = vpop.trf.xlu0
    %437 = vst.msk [vmem:[#allocation2] sm:$0xff] %vm142, %v421
    %438 = vst.msk [vmem:[#allocation2 + $0x8] sm:$0xff] %vm142, %v422
    // Predicated region
    $region22: #{tpu_custom_call.1} parent=1 // pred_check
      _
    $region23: #{tpu_custom_call.1} parent=1 // pred_check_branch
      %440 = sbr.rel (0) target = $region25
    $region24: #{tpu_custom_call.1} parent=1 // pred_region
      %s442 = ssub.s32 256, 256
      %443 = vsyncadd [#allocation3], %s442
      %s444 = sshll.u32 [#allocation2], 4
      %s445 = int_to_ptr.vmem [resolvable:$true] %s444
      %450 = dma.vmem_to_hbm [thread:$0]  %s445, 256, %s5, [#allocation3], 128, 128, 8
    $region25: #{tpu_custom_call.1} parent=1 // pred_fallthru
      _
    // Predicated region
    $region26: #{tpu_custom_call.1} parent=1 // pred_check
      _
    $region27: #{tpu_custom_call.1} parent=1 // pred_check_branch
      %452 = sbr.rel (0) target = $region29
    $region28: #{tpu_custom_call.1} parent=1 // pred_region
      %453 = dma.done [#allocation3], 256
    $region29: #{tpu_custom_call.1} parent=1 // pred_fallthru
      _
    %454 = vsyncpa [#allocation3], 1

</llo_original>
